<compile_context>
chip_gen: v6e
topology: v6e:2x2x1
jax: 0.10.0
libtpu: 0.0.40
codegen_flags: <defaults>
</compile_context>

<pallas_src>
import jax
import jax.numpy as jnp
from jax import lax
from jax.experimental import pallas as pl
from jax.experimental.pallas import tpu as pltpu

IGNORE_LABEL = -1
AUX_WEIGHT = 0.2


def _mix_ce_kernel(l1_ref, l2_ref, lab_ref, out_ref,
                   acc1_ref, acc2_ref, cnt_ref):
    n = pl.program_id(0)
    t = pl.program_id(1)

    @pl.when(jnp.logical_and(n == 0, t == 0))
    def _init():
        acc1_ref[...] = jnp.zeros_like(acc1_ref)
        acc2_ref[...] = jnp.zeros_like(acc2_ref)
        cnt_ref[...] = jnp.zeros_like(cnt_ref)

    l1 = l1_ref[...].astype(jnp.float32)       # (C, TILE_P): classes on sublanes
    l2 = l2_ref[...].astype(jnp.float32)       # (C, TILE_P)
    lab = lab_ref[...]                          # (1, TILE_P) int32

    cls = lax.broadcasted_iota(jnp.int32, l1.shape, 0)   # class id per sublane
    onehot = cls == lab                                   # (C, TILE_P)
    valid = lab != IGNORE_LABEL                           # (1, TILE_P)

    def _ce(logits):
        # per-pixel cross entropy: logsumexp(logits) - logits[label], masked.
        m = jnp.max(logits, axis=0, keepdims=True)                        # (1, TILE_P)
        lse = m + jnp.log(jnp.sum(jnp.exp(logits - m), axis=0, keepdims=True))
        picked = jnp.sum(jnp.where(onehot, logits, 0.0), axis=0, keepdims=True)
        return jnp.where(valid, lse - picked, 0.0)                        # (1, TILE_P)

    # Per-lane partial sums (elementwise VPU adds only).
    acc1_ref[...] += _ce(l1)
    acc2_ref[...] += _ce(l2)
    cnt_ref[...] += valid.astype(jnp.float32)

    # TODO(synk): on v7x, per-tile partial outputs + "parallel" grid semantics
    # would let both TensorCores stream HBM; kept the (proven) serial
    # accumulator + single-scalar output here for robustness.
    @pl.when(jnp.logical_and(n == pl.num_programs(0) - 1,
                             t == pl.num_programs(1) - 1))
    def _finalize():
        total = jnp.sum(cnt_ref[...])
        out_ref[0] = (jnp.sum(acc1_ref[...]) / total
                      + AUX_WEIGHT * (jnp.sum(acc2_ref[...]) / total))


def _choose_tile(hw, c, vmem_budget_bytes=12 << 20, max_tile=8192):
    """Pick the pixel tile (multiple of 128) so the double-buffered streams
    (2 heads x 2 bufs x C x TILE_P x 4B + label bufs + accumulators) stay
    under the VMEM budget — safe even at v5e's 16 MiB scoped default and
    v7x's 64 MiB physical VMEM."""
    bytes_per_pixel = 16 * c + 20
    cap = max(128, (vmem_budget_bytes // bytes_per_pixel) // 128 * 128)
    hw_padded = -(-hw // 128) * 128
    return int(min(cap, max_tile, hw_padded))


def mix_softmax_cross_entropy_loss(pred1, pred2, label, tile_p=None):
    """pred1, pred2: (N, C, H, W) float; label: (N, H, W) int (-1 = ignore)."""
    N, C, H, W = pred1.shape
    HW = H * W
    if tile_p is None:
        tile_p = _choose_tile(HW, C)

    # NCHW-native: pure reshapes, no transpose (no extra HBM round trips).
    x1 = pred1.reshape(N, C, HW)
    x2 = pred2.reshape(N, C, HW)
    lab = label.reshape(N, 1, HW).astype(jnp.int32)

    # Pad pixel dim to a multiple of tile_p; padded pixels are ignored.
    pad = (-HW) % tile_p
    if pad:
        x1 = jnp.pad(x1, ((0, 0), (0, 0), (0, pad)))
        x2 = jnp.pad(x2, ((0, 0), (0, 0), (0, pad)))
        lab = jnp.pad(lab, ((0, 0), (0, 0), (0, pad)),
                      constant_values=IGNORE_LABEL)
    HWp = HW + pad
    T = HWp // tile_p

    out = pl.pallas_call(
        _mix_ce_kernel,
        out_shape=jax.ShapeDtypeStruct((1,), jnp.float32),
        grid_spec=pltpu.PrefetchScalarGridSpec(
            num_scalar_prefetch=0,
            grid=(N, T),
            in_specs=[
                pl.BlockSpec((None, C, tile_p), lambda n, t: (n, 0, t)),
                pl.BlockSpec((None, C, tile_p), lambda n, t: (n, 0, t)),
                pl.BlockSpec((None, 1, tile_p), lambda n, t: (n, 0, t)),
            ],
            out_specs=pl.BlockSpec(memory_space=pltpu.MemorySpace.SMEM),
            scratch_shapes=[
                pltpu.VMEM((1, tile_p), jnp.float32),   # loss1 per-lane partials
                pltpu.VMEM((1, tile_p), jnp.float32),   # loss2 per-lane partials
                pltpu.VMEM((1, tile_p), jnp.float32),   # valid-count partials
            ],
        ),
        compiler_params=pltpu.CompilerParams(
            dimension_semantics=("arbitrary", "arbitrary"),
            vmem_limit_bytes=32 * 1024 * 1024,
        ),
    )(x1, x2, lab)
    return out[0]


if __name__ == "__main__":
    key = jax.random.PRNGKey(0)
    k1, k2, k3 = jax.random.split(key, 3)
    N, C, H, W = 2, 4, 16, 16

    pred1 = jax.random.normal(k1, (N, C, H, W), jnp.float32)
    pred2 = jax.random.normal(k2, (N, C, H, W), jnp.float32)
    # labels include ignore_label (-1)
    label = jax.random.randint(k3, (N, H, W), -1, C, jnp.int32)

    loss = mix_softmax_cross_entropy_loss(pred1, pred2, label)
    loss = jax.block_until_ready(loss)

    # Also exercise the multi-tile accumulation path with a small tile.
    loss_multi = mix_softmax_cross_entropy_loss(pred1, pred2, label, tile_p=128)
    loss_multi = jax.block_until_ready(loss_multi)

    # pure-JAX reference (matches nn.CrossEntropyLoss(ignore_index=-1) mean reduction)
    def ref_ce(logits, lab):
        x = jnp.transpose(logits, (0, 2, 3, 1)).reshape(-1, C)
        l = lab.reshape(-1)
        valid = l != IGNORE_LABEL
        lse = jax.scipy.special.logsumexp(x, axis=-1)
        picked = jnp.take_along_axis(
            x, jnp.clip(l, 0, C - 1)[:, None], axis=-1)[:, 0]
        per = jnp.where(valid, lse - picked, 0.0)
        return jnp.sum(per) / jnp.sum(valid.astype(jnp.float32))

    ref = ref_ce(pred1, label) + AUX_WEIGHT * ref_ce(pred2, label)
    assert jnp.allclose(loss, ref, rtol=1e-5, atol=1e-5), (loss, ref)
    assert jnp.allclose(loss_multi, ref, rtol=1e-5, atol=1e-5), (loss_multi, ref)
    print("KERNEL_OK")
</pallas_src>

<mosaic_0001>
module attributes {stable_mosaic.version = 11 : i64} {
  func.func @_mix_ce_kernel(%arg0: i32, %arg1: i32, %arg2: memref<1x4x256xf32, #tpu.memory_space<vmem>>, %arg3: memref<1x4x256xf32, #tpu.memory_space<vmem>>, %arg4: memref<1x1x256xi32, #tpu.memory_space<vmem>>, %arg5: memref<1xf32, #tpu.memory_space<smem>>, %arg6: memref<1x256xf32, #tpu.memory_space<vmem>>, %arg7: memref<1x256xf32, #tpu.memory_space<vmem>>, %arg8: memref<1x256xf32, #tpu.memory_space<vmem>>) attributes {dimension_semantics = [#tpu.dimension_semantics<arbitrary>, #tpu.dimension_semantics<arbitrary>], iteration_bounds = array<i64: 2, 1>, scalar_prefetch = 0 : i64, scratch_operands = 3 : i64, tpu.core_type = #tpu.core_type<tc>, window_params = [{transform_indices = @transform_0, window_bounds = array<i64: 1, 4, 256>}, {transform_indices = @transform_1, window_bounds = array<i64: 1, 4, 256>}, {transform_indices = @transform_2, window_bounds = array<i64: 1, 1, 256>}, {transform_indices = @transform_3, window_bounds = array<i64: 1>}]} {
    %c0_i32 = arith.constant 0 : i32
    %0 = arith.cmpi eq, %arg0, %c0_i32 : i32
    %c0_i32_0 = arith.constant 0 : i32
    %1 = arith.cmpi eq, %arg1, %c0_i32_0 : i32
    %2 = arith.andi %0, %1 : i1
    %3 = arith.extui %2 : i1 to i32
    %c0_i32_1 = arith.constant 0 : i32
    %4 = arith.cmpi ne, %3, %c0_i32_1 : i32
    scf.if %4 {
      %cst_33 = arith.constant 0.000000e+00 : f32
      %64 = vector.broadcast %cst_33 : f32 to vector<1x256xf32>
      %c0_34 = arith.constant 0 : index
      %c0_35 = arith.constant 0 : index
      %65 = vector.load %arg6[%c0_34, %c0_35] : memref<1x256xf32, #tpu.memory_space<vmem>>, vector<1x256xf32>
      tpu.vector_store %arg6[%c0_34, %c0_35], %64 {strides = array<i32>} : memref<1x256xf32, #tpu.memory_space<vmem>>, vector<1x256xf32>,
      %cst_36 = arith.constant 0.000000e+00 : f32
      %66 = vector.broadcast %cst_36 : f32 to vector<1x256xf32>
      %c0_37 = arith.constant 0 : index
      %c0_38 = arith.constant 0 : index
      %67 = vector.load %arg7[%c0_37, %c0_38] : memref<1x256xf32, #tpu.memory_space<vmem>>, vector<1x256xf32>
      tpu.vector_store %arg7[%c0_37, %c0_38], %66 {strides = array<i32>} : memref<1x256xf32, #tpu.memory_space<vmem>>, vector<1x256xf32>,
      %cst_39 = arith.constant 0.000000e+00 : f32
      %68 = vector.broadcast %cst_39 : f32 to vector<1x256xf32>
      %c0_40 = arith.constant 0 : index
      %c0_41 = arith.constant 0 : index
      %69 = vector.load %arg8[%c0_40, %c0_41] : memref<1x256xf32, #tpu.memory_space<vmem>>, vector<1x256xf32>
      tpu.vector_store %arg8[%c0_40, %c0_41], %68 {strides = array<i32>} : memref<1x256xf32, #tpu.memory_space<vmem>>, vector<1x256xf32>,
    } else {
    }
    %c0 = arith.constant 0 : index
    %c0_2 = arith.constant 0 : index
    %c0_3 = arith.constant 0 : index
    %5 = vector.load %arg2[%c0, %c0_2, %c0_3] : memref<1x4x256xf32, #tpu.memory_space<vmem>>, vector<1x4x256xf32>
    %6 = vector.shape_cast %5 : vector<1x4x256xf32> to vector<4x256xf32>
    %c0_4 = arith.constant 0 : index
    %c0_5 = arith.constant 0 : index
    %c0_6 = arith.constant 0 : index
    %7 = vector.load %arg3[%c0_4, %c0_5, %c0_6] : memref<1x4x256xf32, #tpu.memory_space<vmem>>, vector<1x4x256xf32>
    %8 = vector.shape_cast %7 : vector<1x4x256xf32> to vector<4x256xf32>
    %c0_7 = arith.constant 0 : index
    %c0_8 = arith.constant 0 : index
    %c0_9 = arith.constant 0 : index
    %9 = vector.load %arg4[%c0_7, %c0_8, %c0_9] : memref<1x1x256xi32, #tpu.memory_space<vmem>>, vector<1x1x256xi32>
    %10 = vector.shape_cast %9 : vector<1x1x256xi32> to vector<1x256xi32>
    %11 = tpu.iota {dimensions = array<i32: 0>} : vector<4x256xi32>
    %12 = vector.broadcast %10 : vector<1x256xi32> to vector<4x256xi32>
    %13 = arith.cmpi eq, %11, %12 : vector<4x256xi32>
    %c-1_i32 = arith.constant -1 : i32
    %14 = vector.broadcast %c-1_i32 : i32 to vector<1x256xi32>
    %15 = arith.cmpi ne, %10, %14 : vector<1x256xi32>
    %c0_10 = arith.constant 0 : index
    %c0_11 = arith.constant 0 : index
    %16 = vector.load %arg6[%c0_10, %c0_11] : memref<1x256xf32, #tpu.memory_space<vmem>>, vector<1x256xf32>
    %cst = arith.constant dense<0xFF800000> : vector<256xf32>
    %17 = vector.multi_reduction <maximumf>, %6, %cst [0] : vector<4x256xf32> to vector<256xf32>
    %18 = vector.shape_cast %17 : vector<256xf32> to vector<1x256xf32>
    %19 = vector.broadcast %18 : vector<1x256xf32> to vector<4x256xf32>
    %20 = arith.subf %6, %19 : vector<4x256xf32>
    %21 = math.exp %20 : vector<4x256xf32>
    %cst_12 = arith.constant dense<0.000000e+00> : vector<256xf32>
    %22 = vector.multi_reduction <add>, %21, %cst_12 [0] : vector<4x256xf32> to vector<256xf32>
    %23 = vector.shape_cast %22 : vector<256xf32> to vector<1x256xf32>
    %24 = math.log %23 : vector<1x256xf32>
    %25 = arith.addf %18, %24 : vector<1x256xf32>
    %cst_13 = arith.constant 0.000000e+00 : f32
    %26 = vector.broadcast %cst_13 : f32 to vector<4x256xf32>
    %27 = arith.select %13, %6, %26 : vector<4x256xi1>, vector<4x256xf32>
    %cst_14 = arith.constant dense<0.000000e+00> : vector<256xf32>
    %28 = vector.multi_reduction <add>, %27, %cst_14 [0] : vector<4x256xf32> to vector<256xf32>
    %29 = vector.shape_cast %28 : vector<256xf32> to vector<1x256xf32>
    %30 = arith.subf %25, %29 : vector<1x256xf32>
    %cst_15 = arith.constant 0.000000e+00 : f32
    %31 = vector.broadcast %cst_15 : f32 to vector<1x256xf32>
    %32 = arith.select %15, %30, %31 : vector<1x256xi1>, vector<1x256xf32>
    %33 = arith.addf %16, %32 : vector<1x256xf32>
    %c0_16 = arith.constant 0 : index
    %c0_17 = arith.constant 0 : index
    %34 = vector.load %arg6[%c0_16, %c0_17] : memref<1x256xf32, #tpu.memory_space<vmem>>, vector<1x256xf32>
    tpu.vector_store %arg6[%c0_16, %c0_17], %33 {strides = array<i32>} : memref<1x256xf32, #tpu.memory_space<vmem>>, vector<1x256xf32>,
    %c0_18 = arith.constant 0 : index
    %c0_19 = arith.constant 0 : index
    %35 = vector.load %arg7[%c0_18, %c0_19] : memref<1x256xf32, #tpu.memory_space<vmem>>, vector<1x256xf32>
    %cst_20 = arith.constant dense<0xFF800000> : vector<256xf32>
    %36 = vector.multi_reduction <maximumf>, %8, %cst_20 [0] : vector<4x256xf32> to vector<256xf32>
    %37 = vector.shape_cast %36 : vector<256xf32> to vector<1x256xf32>
    %38 = vector.broadcast %37 : vector<1x256xf32> to vector<4x256xf32>
    %39 = arith.subf %8, %38 : vector<4x256xf32>
    %40 = math.exp %39 : vector<4x256xf32>
    %cst_21 = arith.constant dense<0.000000e+00> : vector<256xf32>
    %41 = vector.multi_reduction <add>, %40, %cst_21 [0] : vector<4x256xf32> to vector<256xf32>
    %42 = vector.shape_cast %41 : vector<256xf32> to vector<1x256xf32>
    %43 = math.log %42 : vector<1x256xf32>
    %44 = arith.addf %37, %43 : vector<1x256xf32>
    %cst_22 = arith.constant 0.000000e+00 : f32
    %45 = vector.broadcast %cst_22 : f32 to vector<4x256xf32>
    %46 = arith.select %13, %8, %45 : vector<4x256xi1>, vector<4x256xf32>
    %cst_23 = arith.constant dense<0.000000e+00> : vector<256xf32>
    %47 = vector.multi_reduction <add>, %46, %cst_23 [0] : vector<4x256xf32> to vector<256xf32>
    %48 = vector.shape_cast %47 : vector<256xf32> to vector<1x256xf32>
    %49 = arith.subf %44, %48 : vector<1x256xf32>
    %cst_24 = arith.constant 0.000000e+00 : f32
    %50 = vector.broadcast %cst_24 : f32 to vector<1x256xf32>
    %51 = arith.select %15, %49, %50 : vector<1x256xi1>, vector<1x256xf32>
    %52 = arith.addf %35, %51 : vector<1x256xf32>
    %c0_25 = arith.constant 0 : index
    %c0_26 = arith.constant 0 : index
    %53 = vector.load %arg7[%c0_25, %c0_26] : memref<1x256xf32, #tpu.memory_space<vmem>>, vector<1x256xf32>
    tpu.vector_store %arg7[%c0_25, %c0_26], %52 {strides = array<i32>} : memref<1x256xf32, #tpu.memory_space<vmem>>, vector<1x256xf32>,
    %c0_27 = arith.constant 0 : index
    %c0_28 = arith.constant 0 : index
    %54 = vector.load %arg8[%c0_27, %c0_28] : memref<1x256xf32, #tpu.memory_space<vmem>>, vector<1x256xf32>
    %55 = arith.extui %15 : vector<1x256xi1> to vector<1x256xi32>
    %56 = arith.sitofp %55 : vector<1x256xi32> to vector<1x256xf32>
    %57 = arith.addf %54, %56 : vector<1x256xf32>
    %c0_29 = arith.constant 0 : index
    %c0_30 = arith.constant 0 : index
    %58 = vector.load %arg8[%c0_29, %c0_30] : memref<1x256xf32, #tpu.memory_space<vmem>>, vector<1x256xf32>
    tpu.vector_store %arg8[%c0_29, %c0_30], %57 {strides = array<i32>} : memref<1x256xf32, #tpu.memory_space<vmem>>, vector<1x256xf32>,
    %c1_i32 = arith.constant 1 : i32
    %59 = arith.cmpi eq, %arg0, %c1_i32 : i32
    %c0_i32_31 = arith.constant 0 : i32
    %60 = arith.cmpi eq, %arg1, %c0_i32_31 : i32
    %61 = arith.andi %59, %60 : i1
    %62 = arith.extui %61 : i1 to i32
    %c0_i32_32 = arith.constant 0 : i32
    %63 = arith.cmpi ne, %62, %c0_i32_32 : i32
    scf.if %63 {
      %c0_33 = arith.constant 0 : index
      %c0_34 = arith.constant 0 : index
      %64 = vector.load %arg8[%c0_33, %c0_34] : memref<1x256xf32, #tpu.memory_space<vmem>>, vector<1x256xf32>
      %65 = vector.shape_cast %64 : vector<1x256xf32> to vector<1x1x256xf32>
      %cst_35 = arith.constant dense<0.000000e+00> : vector<1xf32>
      %66 = vector.multi_reduction <add>, %65, %cst_35 [1, 2] : vector<1x1x256xf32> to vector<1xf32>
      %67 = vector.shape_cast %66 : vector<1xf32> to vector<1x1x1xf32>
      %68 = vector.extract %67[0, 0, 0] : f32 from vector<1x1x1xf32>
      %c0_36 = arith.constant 0 : index
      %c0_37 = arith.constant 0 : index
      %69 = vector.load %arg6[%c0_36, %c0_37] : memref<1x256xf32, #tpu.memory_space<vmem>>, vector<1x256xf32>
      %70 = vector.shape_cast %69 : vector<1x256xf32> to vector<1x1x256xf32>
      %cst_38 = arith.constant dense<0.000000e+00> : vector<1xf32>
      %71 = vector.multi_reduction <add>, %70, %cst_38 [1, 2] : vector<1x1x256xf32> to vector<1xf32>
      %72 = vector.shape_cast %71 : vector<1xf32> to vector<1x1x1xf32>
      %73 = vector.extract %72[0, 0, 0] : f32 from vector<1x1x1xf32>
      %74 = arith.divf %73, %68 : f32
      %c0_39 = arith.constant 0 : index
      %c0_40 = arith.constant 0 : index
      %75 = vector.load %arg7[%c0_39, %c0_40] : memref<1x256xf32, #tpu.memory_space<vmem>>, vector<1x256xf32>
      %76 = vector.shape_cast %75 : vector<1x256xf32> to vector<1x1x256xf32>
      %cst_41 = arith.constant dense<0.000000e+00> : vector<1xf32>
      %77 = vector.multi_reduction <add>, %76, %cst_41 [1, 2] : vector<1x1x256xf32> to vector<1xf32>
      %78 = vector.shape_cast %77 : vector<1xf32> to vector<1x1x1xf32>
      %79 = vector.extract %78[0, 0, 0] : f32 from vector<1x1x1xf32>
      %80 = arith.divf %79, %68 : f32
      %cst_42 = arith.constant 2.000000e-01 : f32
      %81 = arith.mulf %cst_42, %80 : f32
      %82 = arith.addf %74, %81 : f32
      %c0_43 = arith.constant 0 : index
      %83 = memref.load %arg5[%c0_43] : memref<1xf32, #tpu.memory_space<smem>>
      memref.store %82, %arg5[%c0_43] : memref<1xf32, #tpu.memory_space<smem>>
    } else {
    }
    return
  }
  func.func @transform_0(%arg0: i32, %arg1: i32) -> (i32, i32, i32) {
    %c0_i32 = arith.constant 0 : i32
    %c0_i32_0 = arith.constant 0 : i32
    return %arg0, %c0_i32, %arg1 : i32, i32, i32
  }
  func.func @transform_1(%arg0: i32, %arg1: i32) -> (i32, i32, i32) {
    %c0_i32 = arith.constant 0 : i32
    %c0_i32_0 = arith.constant 0 : i32
    return %arg0, %c0_i32, %arg1 : i32, i32, i32
  }
  func.func @transform_2(%arg0: i32, %arg1: i32) -> (i32, i32, i32) {
    %c0_i32 = arith.constant 0 : i32
    %c0_i32_0 = arith.constant 0 : i32
    return %arg0, %c0_i32, %arg1 : i32, i32, i32
  }
  func.func @transform_3(%arg0: i32, %arg1: i32) -> i32 {
    %c0_i32 = arith.constant 0 : i32
    %c0_i32_0 = arith.constant 0 : i32
    return %c0_i32 : i32
  }
}

</mosaic_0001>

<llo_original>
// kernel: tpu_custom_call.1
$region0: #{tpu_custom_call.1}
  #allocation0 [shape = 'u32[]', space=smem, size = 0x4, offset = 0x4, fixed_abs, tag = 'smem constant byte address 0x4 - core index']
  #allocation1 [shape = 'u32[144,128]{1,0:T(1,128)}', space=vmem, size = 0x12000, scoped, tag = 'internal scratch']
  #allocation2 [shape = 'f32[1,256]{1,0:T(1,128)}', space=vmem, size = 0x400, scoped, tag = 'scratch operand']
  #allocation3 [shape = 'f32[1,256]{1,0:T(1,128)}', space=vmem, size = 0x400, scoped, tag = 'scratch operand']
  #allocation4 [shape = 'f32[1,256]{1,0:T(1,128)}', space=vmem, size = 0x400, scoped, tag = 'scratch operand']
  %s0 = inlined_call_operand.hbm [shape: f32[2,4,256], index: 0, kind: input, shape index: {}]
  %s1 = inlined_call_operand.hbm [shape: f32[2,4,256], index: 1, kind: input, shape index: {}]
  %s2 = inlined_call_operand.hbm [shape: s32[2,1,256], index: 2, kind: input, shape index: {}]
  %s3 = inlined_call_operand.hbm [shape: f32[1], index: 3, kind: output, shape index: {}]
  %s4 = sld [smem:[#allocation0]]
  $region65: #{tpu_custom_call.1} parent=0
    _
  %s6 = ssub.s32 1, %s4
  %s7 = scalar_select 0, %s6, %s4
  $region1: #{tpu_custom_call.1} parent=0
    #allocation5 [shape = 'u8[8192]{0}', space=vmem, size = 0x2000, scoped, tag = 'input window, operand 0']
    #allocation6 [shape = 's32[2]{0}', space=sflag, size = 0x8, scoped, tag = 'scoped memory for tpu_custom_call.1']
    #allocation7 [shape = 's32[2]{0}', space=sflag, size = 0x8, scoped, tag = 'scoped memory for tpu_custom_call.1']
    #allocation8 [shape = 'u8[8192]{0}', space=vmem, size = 0x2000, scoped, tag = 'input window, operand 1']
    #allocation9 [shape = 's32[2]{0}', space=sflag, size = 0x8, scoped, tag = 'scoped memory for tpu_custom_call.1']
    #allocation10 [shape = 'u8[2048]{0}', space=vmem, size = 0x800, scoped, tag = 'input window, operand 2']
    #allocation11 [shape = 'u8[512]{0}', space=smem, size = 0x200, scoped, tag = 'output window, operand 0, single buffered']
    %8 = vsyncpa [#allocation6], 0
    %s9 = scalar_lea.sflag [#allocation6], 1
    %10 = vsyncpa %s9, 0
    %11 = vsyncpa [#allocation9], 0
    %s12 = scalar_lea.sflag [#allocation9], 1
    %13 = vsyncpa %s12, 0
    %14 = vsyncpa [#allocation7], 0
    loop: start=0, step=1, limit=4
    $region2: #{tpu_custom_call.1} parent=1 // loop_pre_header
      _
    $region3: #{tpu_custom_call.1} parent=1 // loop_header
      %s16 = sphi 0, %s20
      %p17 = scmp.ge.s32.totalorder %s16, 4
      %s23 = sphi 0, %s35
      %s24 = sphi 0, %s31
      %s25 = sphi 0, %s23
      %s26 = sphi 0, %s24
      %s27 = sphi 0, %s25
      %s28 = sphi 0, %s26
      %s40 = sphi 0, %s42
      %s43 = sphi 0, %s40
      %s44 = sphi 0, %s43
      %s60 = sphi 0, %s44
      %s68 = sphi 0, %s70
      %s71 = sphi 0, %s68
      %s72 = sphi 0, %s71
      %s88 = sphi 0, %s72
      %s96 = sphi 0, %s98
      %s99 = sphi 0, %s96
      %s100 = sphi 0, %s99
      %s116 = sphi 0, %s100
      %s120 = sphi 0, %s120
      %s122 = sphi 0, %s120
      %s123 = sphi 0, %s122
      %s137 = sphi 0, %s123
    $region4: #{tpu_custom_call.1} parent=1 // loop_header_branch
      %19 = sbr.rel (%p17) target = $region8
    $region5: #{tpu_custom_call.1} parent=1 // loop_body
      %s21 = ssub.s32 %s16, 1
      %s22 = ssub.s32 %s16, 2
      %s29 = sadd.s32 1, %s24
      %p30 = scmp.ge.s32.totalorder %s29, 1
      %s31 = scalar_select %p30, 0, %s29
      %s32 = sadd.s32 1, %s23
      %s33 = scalar_select %p30, %s32, %s23
      %p34 = scmp.ge.s32.totalorder %s33, 2
      %s35 = scalar_select %p34, 0, %s33
      %s36 = ssub.s32 %s23, %s35
      %s37 = ssub.s32 %s24, %s31
      %s38 = sor.u32 %s36, %s37
      %p39 = scmp.eq.s32.totalorder %s38, 0
      %s41 = sadd.s32 %s40, 1
      %s42 = scalar_select %p39, %s40, %s41
      %p45 = pneg %p39
      %p46 = scmp.eq.s32.totalorder %s16, 1
      %p47 = por %p45, %p46
      %p48 = scmp.ne.s32.totalorder %s40, %s43
      %p49 = scmp.eq.s32.totalorder %s16, 0
      %p50 = por %p48, %p49
      %p51 = scmp.ne.s32.totalorder %s40, %s43
      %p52 = scmp.eq.s32.totalorder %s21, 1
      %p53 = por %p51, %p52
      %p54 = scmp.ne.s32.totalorder %s43, %s44
      %p55 = scmp.eq.s32.totalorder %s21, 0
      %p56 = por %p54, %p55
      %p57 = scmp.ne.s32.totalorder %s43, %s44
      %p58 = scmp.eq.s32.totalorder %s22, 1
      %p59 = por %p57, %p58
      %p61 = scmp.ne.s32.totalorder %s44, %s60
      %p62 = scmp.eq.s32.totalorder %s22, 0
      %p63 = por %p61, %p62
      %s64 = ssub.s32 %s23, %s35
      %s65 = ssub.s32 %s24, %s31
      %s66 = sor.u32 %s64, %s65
      %p67 = scmp.eq.s32.totalorder %s66, 0
      %s69 = sadd.s32 %s68, 1
      %s70 = scalar_select %p67, %s68, %s69
      %p73 = pneg %p67
      %p74 = scmp.eq.s32.totalorder %s16, 1
      %p75 = por %p73, %p74
      %p76 = scmp.ne.s32.totalorder %s68, %s71
      %p77 = scmp.eq.s32.totalorder %s16, 0
      %p78 = por %p76, %p77
      %p79 = scmp.ne.s32.totalorder %s68, %s71
      %p80 = scmp.eq.s32.totalorder %s21, 1
      %p81 = por %p79, %p80
      %p82 = scmp.ne.s32.totalorder %s71, %s72
      %p83 = scmp.eq.s32.totalorder %s21, 0
      %p84 = por %p82, %p83
      %p85 = scmp.ne.s32.totalorder %s71, %s72
      %p86 = scmp.eq.s32.totalorder %s22, 1
      %p87 = por %p85, %p86
      %p89 = scmp.ne.s32.totalorder %s72, %s88
      %p90 = scmp.eq.s32.totalorder %s22, 0
      %p91 = por %p89, %p90
      %s92 = ssub.s32 %s23, %s35
      %s93 = ssub.s32 %s24, %s31
      %s94 = sor.u32 %s92, %s93
      %p95 = scmp.eq.s32.totalorder %s94, 0
      %s97 = sadd.s32 %s96, 1
      %s98 = scalar_select %p95, %s96, %s97
      %p101 = pneg %p95
      %p102 = scmp.eq.s32.totalorder %s16, 1
      %p103 = por %p101, %p102
      %p104 = scmp.ne.s32.totalorder %s96, %s99
      %p105 = scmp.eq.s32.totalorder %s16, 0
      %p106 = por %p104, %p105
      %p107 = scmp.ne.s32.totalorder %s96, %s99
      %p108 = scmp.eq.s32.totalorder %s21, 1
      %p109 = por %p107, %p108
      %p110 = scmp.ne.s32.totalorder %s99, %s100
      %p111 = scmp.eq.s32.totalorder %s21, 0
      %p112 = por %p110, %p111
      %p113 = scmp.ne.s32.totalorder %s99, %s100
      %p114 = scmp.eq.s32.totalorder %s22, 1
      %p115 = por %p113, %p114
      %p117 = scmp.ne.s32.totalorder %s100, %s116
      %p118 = scmp.eq.s32.totalorder %s22, 0
      %p119 = por %p117, %p118
      %s121 = sadd.s32 %s120, 1
      %p124 = scmp.eq.s32.totalorder %s16, 1
      %p125 = scmp.ne.s32.totalorder %s120, %s122
      %p126 = scmp.eq.s32.totalorder %s16, 0
      %p127 = por %p125, %p126
      %p128 = scmp.ne.s32.totalorder %s120, %s122
      %p129 = scmp.eq.s32.totalorder %s21, 1
      %p130 = por %p128, %p129
      %p131 = scmp.ne.s32.totalorder %s122, %s123
      %p132 = scmp.eq.s32.totalorder %s21, 0
      %p133 = por %p131, %p132
      %p134 = scmp.ne.s32.totalorder %s122, %s123
      %p135 = scmp.eq.s32.totalorder %s22, 1
      %p136 = por %p134, %p135
      %p138 = scmp.ne.s32.totalorder %s123, %s137
      %p139 = scmp.eq.s32.totalorder %s22, 0
      %p140 = por %p138, %p139
      %p141 = scmp.le.s32.totalorder 1, %s16
      %p142 = scmp.lt.s32.totalorder %s16, 3
      %p143 = pnand %p141, %p142
      %p144 = pneg %p143
      // Predicated region
      $region9: #{tpu_custom_call.1} parent=5 // pred_check
        _
      $region10: #{tpu_custom_call.1} parent=5 // pred_check_branch
        %146 = sbr.rel (%p143) target = $region12
      $region11: #{tpu_custom_call.1} parent=5 // pred_region
        %s147 = ssub.s32 %s16, 1
      $region12: #{tpu_custom_call.1} parent=5 // pred_fallthru
        _
      %p148 = scmp.lt.s32.totalorder %s16, 2
      // Predicated region
      $region13: #{tpu_custom_call.1} parent=5 // pred_check
        %p149 = pneg %p148
      $region14: #{tpu_custom_call.1} parent=5 // pred_check_branch
        %151 = sbr.rel (%p149) target = $region16
      $region15: #{tpu_custom_call.1} parent=5 // pred_region
        // Predicated region
        $region17: #{tpu_custom_call.1} parent=15 // pred_check
          %p152 = pneg %p50
        $region18: #{tpu_custom_call.1} parent=15 // pred_check_branch
          %154 = sbr.rel (%p152) target = $region20
        $region19: #{tpu_custom_call.1} parent=15 // pred_region
          %s155 = sand.u32 %s40, 1
          %s156 = scalar_lea.sflag [#allocation6], %s155
          %s157 = sand.u32 %s40, 1
          %s158 = smul.addr %s157, 8
          %s159 = scalar_lea.vmem [#allocation5], %s158
          %s160 = smul.u32 2, %s24
          %s162 = ssub.s32 128, 128
          %163 = vsyncadd %s156, %s162
          %s164 = smul.addr %s23, 2
          %s165 = sadd.s32 %s160, %s164
          %s166 = smul.addr %s165, 64
          %s167 = scalar_lea.hbm %s0, %s166
          %s169 = sshll.u32 %s159, 4
          %s170 = int_to_ptr.vmem [resolvable:$true] %s169
          %172 = dma.hbm_to_vmem [thread:$0]  %s167, 128, %s170, %s156
        $region20: #{tpu_custom_call.1} parent=15 // pred_fallthru
          _
        // Predicated region
        $region21: #{tpu_custom_call.1} parent=15 // pred_check
          %p173 = pneg %p78
        $region22: #{tpu_custom_call.1} parent=15 // pred_check_branch
          %175 = sbr.rel (%p173) target = $region24
        $region23: #{tpu_custom_call.1} parent=15 // pred_region
          %s176 = sand.u32 %s16, 1
          %s177 = scalar_lea.sflag [#allocation9], %s176
          %s178 = sand.u32 %s68, 1
          %s179 = smul.addr %s178, 8
          %s180 = scalar_lea.vmem [#allocation8], %s179
          %s181 = smul.u32 2, %s24
          %s183 = ssub.s32 128, 128
          %184 = vsyncadd %s177, %s183
          %s185 = smul.addr %s23, 2
          %s186 = sadd.s32 %s181, %s185
          %s187 = smul.addr %s186, 64
          %s188 = scalar_lea.hbm %s1, %s187
          %s190 = sshll.u32 %s180, 4
          %s191 = int_to_ptr.vmem [resolvable:$true] %s190
          %193 = dma.hbm_to_vmem [thread:$0]  %s188, 128, %s191, %s177
        $region24: #{tpu_custom_call.1} parent=15 // pred_fallthru
          _
        // Predicated region
        $region25: #{tpu_custom_call.1} parent=15 // pred_check
          %p194 = pneg %p106
        $region26: #{tpu_custom_call.1} parent=15 // pred_check_branch
          %196 = sbr.rel (%p194) target = $region28
        $region27: #{tpu_custom_call.1} parent=15 // pred_region
          %s197 = sand.u32 %s16, 1
          %s198 = scalar_lea.sflag [#allocation9], %s197
          %s199 = sand.u32 %s96, 1
          %s200 = smul.addr %s199, 2
          %s201 = scalar_lea.vmem [#allocation10], %s200
          %s202 = smul.u32 2, %s24
          %s204 = ssub.s32 32, 32
          %205 = vsyncadd %s198, %s204
          %s206 = smul.addr %s23, 2
          %s207 = sadd.s32 %s202, %s206
          %s208 = smul.addr %s207, 16
          %s209 = scalar_lea.hbm %s2, %s208
          %s211 = sshll.u32 %s201, 4
          %s212 = int_to_ptr.vmem [resolvable:$true] %s211
          %214 = dma.hbm_to_vmem [thread:$0]  %s209, 32, %s212, %s198
        $region28: #{tpu_custom_call.1} parent=15 // pred_fallthru
          _
      $region16: #{tpu_custom_call.1} parent=5 // pred_fallthru
        _
      %p215 = scmp.le.s32.totalorder 1, %s16
      %p216 = scmp.lt.s32.totalorder %s16, 3
      %p217 = pnand %p215, %p216
      %p218 = pneg %p217
      // Predicated region
      $region29: #{tpu_custom_call.1} parent=5 // pred_check
        _
      $region30: #{tpu_custom_call.1} parent=5 // pred_check_branch
        %220 = sbr.rel (%p217) target = $region32
      $region31: #{tpu_custom_call.1} parent=5 // pred_region
        %s221 = ssub.s32 %s16, 1
        %s222 = sand.u32 %s43, 1
        %s223 = scalar_lea.sflag [#allocation6], %s222
        %s224 = sand.u32 %s43, 1
        %s225 = smul.addr %s224, 8
        %s226 = scalar_lea.vmem [#allocation5], %s225
        // Predicated region
        $region33: #{tpu_custom_call.1} parent=31 // pred_check
          %p227 = pneg %p56
        $region34: #{tpu_custom_call.1} parent=31 // pred_check_branch
          %229 = sbr.rel (%p227) target = $region36
        $region35: #{tpu_custom_call.1} parent=31 // pred_region
          %230 = dma.done %s223, 128
        $region36: #{tpu_custom_call.1} parent=31 // pred_fallthru
          _
        %s231 = sand.u32 %s21, 1
        %s232 = scalar_lea.sflag [#allocation9], %s231
        %s233 = sand.u32 %s71, 1
        %s234 = smul.addr %s233, 8
        %s235 = scalar_lea.vmem [#allocation8], %s234
        // Predicated region
        $region37: #{tpu_custom_call.1} parent=31 // pred_check
          %p236 = pneg %p84
        $region38: #{tpu_custom_call.1} parent=31 // pred_check_branch
          %238 = sbr.rel (%p236) target = $region40
        $region39: #{tpu_custom_call.1} parent=31 // pred_region
          %239 = dma.done %s232, 128
        $region40: #{tpu_custom_call.1} parent=31 // pred_fallthru
          _
        %s240 = sand.u32 %s21, 1
        %s241 = scalar_lea.sflag [#allocation9], %s240
        %s242 = sand.u32 %s99, 1
        %s243 = smul.addr %s242, 2
        %s244 = scalar_lea.vmem [#allocation10], %s243
        // Predicated region
        $region41: #{tpu_custom_call.1} parent=31 // pred_check
          %p245 = pneg %p112
        $region42: #{tpu_custom_call.1} parent=31 // pred_check_branch
          %247 = sbr.rel (%p245) target = $region44
        $region43: #{tpu_custom_call.1} parent=31 // pred_region
          %248 = dma.done %s241, 32
        $region44: #{tpu_custom_call.1} parent=31 // pred_fallthru
          _
        %s249 = sand.u32 %s43, 1
        %s250 = scalar_lea.sflag [#allocation6], %s249
        %s251 = sand.u32 %s43, 1
        %s252 = smul.addr %s251, 8
        %s253 = scalar_lea.vmem [#allocation5], %s252
        %p254 = pneg %p56
        %p255 = pneg %p53
        %s256 = sand.u32 %s21, 1
        %s257 = scalar_lea.sflag [#allocation9], %s256
        %s258 = sand.u32 %s71, 1
        %s259 = smul.addr %s258, 8
        %s260 = scalar_lea.vmem [#allocation8], %s259
        %p261 = pneg %p84
        %p262 = pneg %p81
        %s263 = sand.u32 %s21, 1
        %s264 = scalar_lea.sflag [#allocation9], %s263
        %s265 = sand.u32 %s99, 1
        %s266 = smul.addr %s265, 2
        %s267 = scalar_lea.vmem [#allocation10], %s266
        %p268 = pneg %p112
        %p269 = pneg %p109
        %p270 = pneg %p133
        %p271 = pneg %p130
        %s272 = smul.u32 2, %s26
        %s273 = smul.u32 2, %s26
        %s274 = smul.u32 2, %s26
        %p275 = scmp.eq.s32.totalorder %s25, 0
        %p276 = scmp.eq.s32.totalorder %s26, 0
        %p277 = pnand %p275, %p276
        %p278 = pneg %p277
        // Predicated region
        $region45: #{tpu_custom_call.1} parent=31 // pred_check
          _
        $region46: #{tpu_custom_call.1} parent=31 // pred_check_branch
          %280 = sbr.rel (%p277) target = $region48
        $region47: #{tpu_custom_call.1} parent=31 // pred_region
          %v281 = vlaneseq
          %vm282 = vcmp.ge.s32.totalorder %v281, 0
          %vm283 = vcmp.lt.s32.totalorder %v281, 256
          %vm284 = vmand %vm282, %vm283
          %285 = vst.msk [vmem:[#allocation2] sm:$0x3] %vm284, 0.0
          %286 = vst.msk [vmem:[#allocation3] sm:$0x3] %vm284, 0.0
          %287 = vst.msk [vmem:[#allocation4] sm:$0x3] %vm284, 0.0
        $region48: #{tpu_custom_call.1} parent=31 // pred_fallthru
          _
        %v288 = vld [vmem:[%s226] sm:$0xff]
        %v289 = vld [vmem:[%s235] sm:$0xff]
        %v290 = vld [vmem:[%s244] sm:$0x3]
        %v291 = vlaneseq
        %v292 = vshrl.u32 %v291, 7
        %v293 = vlaneseq
        %v294 = vshrl.u32 %v293, 7
        %v295 = vsub.s32 0, %v294
        %v296 = vrot.slane %v290, %v295
        %v297 = vlaneseq
        %v298 = vshrl.u32 %v297, 7
        %v299 = vsub.s32 1, %v298
        %v300 = vrot.slane %v290, %v299
        %vm301 = vcmp.eq.s32.totalorder %v292, %v296
        %vm302 = vcmp.eq.s32.totalorder %v292, %v300
        %vm303 = vcmp.ne.s32.totalorder %v290, 4294967295
        %v304 = vld [vmem:[#allocation2] sm:$0x3]
        %v306 = vcombine.high %v288, %v288
        %vm308 = vcmask 1043456
        %v309 = vsel %vm308, %v288, -inf
        %v310 = vrot.slane %v309, 4
        %v311 = vmax.f32 %v309, %v310
        %v312 = vrot.slane %v311, 2
        %v313 = vmax.f32 %v311, %v312
        %v314 = vrot.slane %v313, 1
        %v315 = vmax.f32 %v313, %v314
        %v316 = vsel %vm308, %v306, -inf
        %v317 = vrot.slane %v316, 4
        %v318 = vmax.f32 %v316, %v317
        %v319 = vrot.slane %v318, 2
        %v320 = vmax.f32 %v318, %v319
        %v321 = vrot.slane %v320, 1
        %v322 = vmax.f32 %v320, %v321
        %v325 = vcombine.low %v315, %v322
        %v327 = vsub.f32 %v288, %v325
        %v328 = vmul.f32 %v327, 1.442695
        %v329 = vpow.pop %v328
        %v331 = vcombine.high %v329, %v329
        %v333 = vsel %vm308, %v329, 0.0
        %v334 = vrot.slane %v333, 4
        %v335 = vadd.f32 %v333, %v334
        %v336 = vrot.slane %v335, 2
        %v337 = vadd.f32 %v335, %v336
        %v338 = vrot.slane %v337, 1
        %v339 = vadd.f32 %v337, %v338
        %v340 = vsel %vm308, %v331, 0.0
        %v341 = vrot.slane %v340, 4
        %v342 = vadd.f32 %v340, %v341
        %v343 = vrot.slane %v342, 2
        %v344 = vadd.f32 %v342, %v343
        %v345 = vrot.slane %v344, 1
        %v346 = vadd.f32 %v344, %v345
        %v347 = vlog2.pop %v339
        %v348 = vmul.f32 %v347, 0.6931472
        %v349 = vlog2.pop %v346
        %v350 = vmul.f32 %v349, 0.6931472
        %v351 = vadd.f32 %v315, %v348
        %v352 = vadd.f32 %v322, %v350
        %v353 = vsel %vm301, %v288, 0.0
        %v354 = vsel %vm302, %v306, 0.0
        %v355 = vsel %vm308, %v353, 0.0
        %v356 = vrot.slane %v355, 4
        %v357 = vadd.f32 %v355, %v356
        %v358 = vrot.slane %v357, 2
        %v359 = vadd.f32 %v357, %v358
        %v360 = vrot.slane %v359, 1
        %v361 = vadd.f32 %v359, %v360
        %v362 = vsel %vm308, %v354, 0.0
        %v363 = vrot.slane %v362, 4
        %v364 = vadd.f32 %v362, %v363
        %v365 = vrot.slane %v364, 2
        %v366 = vadd.f32 %v364, %v365
        %v367 = vrot.slane %v366, 1
        %v368 = vadd.f32 %v366, %v367
        %v369 = vsub.f32 %v351, %v361
        %v370 = vsub.f32 %v352, %v368
        %v373 = vcombine.low %v369, %v370
        %v375 = vunpack.c.l.s4 1966171168
        %v376 = vunpack.c.0.s8 %v375
        %v377 = vlaneseq
        %v378 = vshrl.u32 %v377, 7
        %v379 = vsub.s32 %v376, %v378
        %v380 = vrot.slane %v373, %v379
        %v382 = vunpack.c.l.s4 1966171168
        %v383 = vunpack.c.0.s8 %v382
        %v384 = vlaneseq
        %v385 = vshrl.u32 %v384, 7
        %v386 = vsub.s32 %v383, %v385
        %v387 = vrot.slane %v380, %v386
        %v389 = vsel %vm303, %v387, 0.0
        %v390 = vadd.f32 %v304, %v389
        %v391 = vlaneseq
        %vm392 = vcmp.ge.s32.totalorder %v391, 0
        %vm393 = vcmp.lt.s32.totalorder %v391, 256
        %vm394 = vmand %vm392, %vm393
        %395 = vst.msk [vmem:[#allocation2] sm:$0x3] %vm394, %v390
        %v396 = vld [vmem:[#allocation3] sm:$0x3]
        %v398 = vcombine.high %v289, %v289
        %v400 = vsel %vm308, %v289, -inf
        %v401 = vrot.slane %v400, 4
        %v402 = vmax.f32 %v400, %v401
        %v403 = vrot.slane %v402, 2
        %v404 = vmax.f32 %v402, %v403
        %v405 = vrot.slane %v404, 1
        %v406 = vmax.f32 %v404, %v405
        %v407 = vsel %vm308, %v398, -inf
        %v408 = vrot.slane %v407, 4
        %v409 = vmax.f32 %v407, %v408
        %v410 = vrot.slane %v409, 2
        %v411 = vmax.f32 %v409, %v410
        %v412 = vrot.slane %v411, 1
        %v413 = vmax.f32 %v411, %v412
        %v416 = vcombine.low %v406, %v413
        %v418 = vsub.f32 %v289, %v416
        %v419 = vmul.f32 %v418, 1.442695
        %v420 = vpow.pop %v419
        %v422 = vcombine.high %v420, %v420
        %v424 = vsel %vm308, %v420, 0.0
        %v425 = vrot.slane %v424, 4
        %v426 = vadd.f32 %v424, %v425
        %v427 = vrot.slane %v426, 2
        %v428 = vadd.f32 %v426, %v427
        %v429 = vrot.slane %v428, 1
        %v430 = vadd.f32 %v428, %v429
        %v431 = vsel %vm308, %v422, 0.0
        %v432 = vrot.slane %v431, 4
        %v433 = vadd.f32 %v431, %v432
        %v434 = vrot.slane %v433, 2
        %v435 = vadd.f32 %v433, %v434
        %v436 = vrot.slane %v435, 1
        %v437 = vadd.f32 %v435, %v436
        %v438 = vlog2.pop %v430
        %v439 = vmul.f32 %v438, 0.6931472
        %v440 = vlog2.pop %v437
        %v441 = vmul.f32 %v440, 0.6931472
        %v442 = vadd.f32 %v406, %v439
        %v443 = vadd.f32 %v413, %v441
        %v444 = vsel %vm301, %v289, 0.0
        %v445 = vsel %vm302, %v398, 0.0
        %v446 = vsel %vm308, %v444, 0.0
        %v447 = vrot.slane %v446, 4
        %v448 = vadd.f32 %v446, %v447
        %v449 = vrot.slane %v448, 2
        %v450 = vadd.f32 %v448, %v449
        %v451 = vrot.slane %v450, 1
        %v452 = vadd.f32 %v450, %v451
        %v453 = vsel %vm308, %v445, 0.0
        %v454 = vrot.slane %v453, 4
        %v455 = vadd.f32 %v453, %v454
        %v456 = vrot.slane %v455, 2
        %v457 = vadd.f32 %v455, %v456
        %v458 = vrot.slane %v457, 1
        %v459 = vadd.f32 %v457, %v458
        %v460 = vsub.f32 %v442, %v452
        %v461 = vsub.f32 %v443, %v459
        %v464 = vcombine.low %v460, %v461
        %v466 = vunpack.c.l.s4 1966171168
        %v467 = vunpack.c.0.s8 %v466
        %v468 = vlaneseq
        %v469 = vshrl.u32 %v468, 7
        %v470 = vsub.s32 %v467, %v469
        %v471 = vrot.slane %v464, %v470
        %v473 = vunpack.c.l.s4 1966171168
        %v474 = vunpack.c.0.s8 %v473
        %v475 = vlaneseq
        %v476 = vshrl.u32 %v475, 7
        %v477 = vsub.s32 %v474, %v476
        %v478 = vrot.slane %v471, %v477
        %v480 = vsel %vm303, %v478, 0.0
        %v481 = vadd.f32 %v396, %v480
        %482 = vst.msk [vmem:[#allocation3] sm:$0x3] %vm394, %v481
        %v483 = vld [vmem:[#allocation4] sm:$0x3]
        %v484 = vsel %vm303, 1, 0
        %v485 = vcvt.s32.f32 %v484
        %v486 = vadd.f32 %v483, %v485
        %487 = vst.msk [vmem:[#allocation4] sm:$0x3] %vm394, %v486
        %p488 = scmp.eq.s32.totalorder %s25, 1
        %p489 = pnand %p488, %p276
        %p490 = pneg %p489
        // Predicated region
        $region49: #{tpu_custom_call.1} parent=31 // pred_check
          _
        $region50: #{tpu_custom_call.1} parent=31 // pred_check_branch
          %492 = sbr.rel (%p489) target = $region52
        $region51: #{tpu_custom_call.1} parent=31 // pred_region
          %v493 = vld [vmem:[#allocation4] sm:$0x3]
          %v495 = vlaneseq
          %v496 = vshrl.u32 %v495, 7
          %v497 = vsub.s32 0, %v496
          %v498 = vrot.slane %v493, %v497
          %v499 = vlaneseq
          %v500 = vshrl.u32 %v499, 7
          %v501 = vsub.s32 1, %v500
          %v502 = vrot.slane %v493, %v501
          %vm505 = vcmask 1040384
          %v506 = vsel %vm505, %v498, 0.0
          %v507 = vsel %vm505, %v502, 0.0
          %v508 = vadd.f32 %v506, %v507
          %509 = vadd.xlane.f32.xlu0 %v508
          %v510 = vpop.xlane.xlu0 %509
          %v511 = vrot.slane %v510, 4
          %v512 = vadd.f32 %v510, %v511
          %v513 = vrot.slane %v512, 2
          %v514 = vadd.f32 %v512, %v513
          %v515 = vrot.slane %v514, 1
          %v516 = vadd.f32 %v514, %v515
          %s517 = vtos %v516
          %v518 = vld [vmem:[#allocation2] sm:$0x3]
          %v520 = vlaneseq
          %v521 = vshrl.u32 %v520, 7
          %v522 = vsub.s32 0, %v521
          %v523 = vrot.slane %v518, %v522
          %v524 = vlaneseq
          %v525 = vshrl.u32 %v524, 7
          %v526 = vsub.s32 1, %v525
          %v527 = vrot.slane %v518, %v526
          %v530 = vsel %vm505, %v523, 0.0
          %v531 = vsel %vm505, %v527, 0.0
          %v532 = vadd.f32 %v530, %v531
          %533 = vadd.xlane.f32.xlu0 %v532
          %v534 = vpop.xlane.xlu0 %533
          %v535 = vrot.slane %v534, 4
          %v536 = vadd.f32 %v534, %v535
          %v537 = vrot.slane %v536, 2
          %v538 = vadd.f32 %v536, %v537
          %v539 = vrot.slane %v538, 1
          %v540 = vadd.f32 %v538, %v539
          %s541 = vtos %v540
          %v542 = vstv %s517
          %v543 = vrcp.pop %v542
          %s544 = vtos %v543
          %s545 = smul.f32 %s541, %s544
          %v546 = vld [vmem:[#allocation3] sm:$0x3]
          %v548 = vlaneseq
          %v549 = vshrl.u32 %v548, 7
          %v550 = vsub.s32 0, %v549
          %v551 = vrot.slane %v546, %v550
          %v552 = vlaneseq
          %v553 = vshrl.u32 %v552, 7
          %v554 = vsub.s32 1, %v553
          %v555 = vrot.slane %v546, %v554
          %v558 = vsel %vm505, %v551, 0.0
          %v559 = vsel %vm505, %v555, 0.0
          %v560 = vadd.f32 %v558, %v559
          %561 = vadd.xlane.f32.xlu0 %v560
          %v562 = vpop.xlane.xlu0 %561
          %v563 = vrot.slane %v562, 4
          %v564 = vadd.f32 %v562, %v563
          %v565 = vrot.slane %v564, 2
          %v566 = vadd.f32 %v564, %v565
          %v567 = vrot.slane %v566, 1
          %v568 = vadd.f32 %v566, %v567
          %s569 = vtos %v568
          %v570 = vstv %s517
          %v571 = vrcp.pop %v570
          %s572 = vtos %v571
          %s573 = smul.f32 %s569, %s572
          %s574 = smul.f32 %s573, 0.2
          %s575 = sadd.f32 %s545, %s574
          %s576 = scalar_lea.smem [#allocation11], 0
          %577 = sst [smem:[%s576]] %s575
        $region52: #{tpu_custom_call.1} parent=31 // pred_fallthru
          _
        // Predicated region
        $region53: #{tpu_custom_call.1} parent=31 // pred_check
          %p578 = pneg %p130
        $region54: #{tpu_custom_call.1} parent=31 // pred_check_branch
          %580 = sbr.rel (%p578) target = $region56
        $region55: #{tpu_custom_call.1} parent=31 // pred_region
          %s582 = ssub.s32 16, 16
          %583 = vsyncadd [#allocation7], %s582
          %586 = dma.smem_to_hbm [#allocation11], 16, %s3, [#allocation7]
        $region56: #{tpu_custom_call.1} parent=31 // pred_fallthru
          _
        // Predicated region
        $region57: #{tpu_custom_call.1} parent=31 // pred_check
          %p587 = pneg %p130
        $region58: #{tpu_custom_call.1} parent=31 // pred_check_branch
          %589 = sbr.rel (%p587) target = $region60
        $region59: #{tpu_custom_call.1} parent=31 // pred_region
          %590 = dma.done [#allocation7], 16
        $region60: #{tpu_custom_call.1} parent=31 // pred_fallthru
          _
        %591 = sfence
      $region32: #{tpu_custom_call.1} parent=5 // pred_fallthru
        _
      %p592 = scmp.le.s32.totalorder 2, %s16
      // Predicated region
      $region61: #{tpu_custom_call.1} parent=5 // pred_check
        %p593 = pneg %p592
      $region62: #{tpu_custom_call.1} parent=5 // pred_check_branch
        %595 = sbr.rel (%p593) target = $region64
      $region63: #{tpu_custom_call.1} parent=5 // pred_region
        %s596 = ssub.s32 %s16, 2
      $region64: #{tpu_custom_call.1} parent=5 // pred_fallthru
        _
    $region6: #{tpu_custom_call.1} parent=1 // loop_footer
      %s20 = sadd.s32 1, %s16
    $region7: #{tpu_custom_call.1} parent=1 // loop_footer_branch
      %15 = sbr.rel target = $region3
    $region8: #{tpu_custom_call.1} parent=1 // loop_exit
      _
    %597 = vsyncpa [#allocation6], 1
    %s598 = scalar_lea.sflag [#allocation6], 1
    %599 = vsyncpa %s598, 1
    %600 = vsyncpa [#allocation9], 1
    %s601 = scalar_lea.sflag [#allocation9], 1
    %602 = vsyncpa %s601, 1
    %603 = vsyncpa [#allocation7], 1
    %s604 = scalar_lea.sflag [#allocation7], 1
    %605 = vsyncpa %s604, 1

</llo_original>
